<compile_context>
chip_gen: v7x
topology: tpu7x:2x2x1
jax: 0.10.0
libtpu: 0.0.40
codegen_flags: <defaults>
</compile_context>

<pallas_src>
import functools

import jax
import jax.numpy as jnp
from jax import lax
from jax.experimental import pallas as pl
from jax.experimental.pallas import tpu as pltpu

CLASSES = 18
EPSILON = 1e-7


def _custom_loss_kernel(logits_ref, labels_ref, out_ref,
                        tp_acc, psum_acc, cnt_acc, ce_acc,
                        *, n_total: int, block_cols: int, classes: int,
                        epsilon: float):
    i = pl.program_id(0)

    # ---- init accumulators on the first grid step -------------------------
    @pl.when(i == 0)
    def _():
        tp_acc[...] = jnp.zeros_like(tp_acc)
        psum_acc[...] = jnp.zeros_like(psum_acc)
        cnt_acc[...] = jnp.zeros_like(cnt_acc)
        ce_acc[...] = jnp.zeros_like(ce_acc)

    logits = logits_ref[...].astype(jnp.float32)    # (C, TM): classes x batch
    labels = labels_ref[...]                        # (1, TM) int32
    c, tm = logits.shape

    # ---- validity mask for the (possibly padded) trailing tile ------------
    col_ids = i * block_cols + lax.broadcasted_iota(jnp.int32, (1, tm), 1)
    valid = col_ids < n_total                        # (1, TM) bool
    validf = valid.astype(jnp.float32)

    # Scrub padded columns so exp/log stay finite (mask alone can't kill NaNs).
    logits = jnp.where(valid, logits, 0.0)

    # one-hot along the class (sublane) axis, zeroed on padded columns
    class_ids = lax.broadcasted_iota(jnp.int32, (c, tm), 0)
    one_hot = jnp.where(jnp.logical_and(labels == class_ids, valid), 1.0, 0.0)

    # ---- numerically stable softmax / log-softmax over classes (axis 0) ---
    m = jnp.max(logits, axis=0, keepdims=True)       # (1, TM)
    shifted = logits - m
    exp_s = jnp.exp(shifted)
    sum_exp = jnp.sum(exp_s, axis=0, keepdims=True)  # (1, TM)
    probs = exp_s * pl.reciprocal(sum_exp, approx=True)
    log_probs = shifted - jnp.log(sum_exp)

    # ---- accumulate per-class partial sums (lane reductions -> (C, 1)) ----
    tp_acc[...] += jnp.sum(one_hot * probs, axis=1, keepdims=True)
    psum_acc[...] += jnp.sum(probs * validf, axis=1, keepdims=True)
    cnt_acc[...] += jnp.sum(one_hot, axis=1, keepdims=True)
    ce_acc[...] += jnp.sum(one_hot * log_probs, axis=1, keepdims=True)

    # ---- finalize on the last grid step ------------------------------------
    @pl.when(i == pl.num_programs(0) - 1)
    def _():
        eps = jnp.float32(epsilon)
        tp = tp_acc[...]                       # (C, 1)
        fp = psum_acc[...] - tp                # colsum(probs) - tp
        fn = cnt_acc[...] - tp                 # label counts  - tp
        precision = tp / (tp + fp + eps)
        recall = tp / (tp + fn + eps)
        f1 = 2.0 * precision * recall / (precision + recall + eps)
        f1 = jnp.clip(f1, eps, 1.0 - eps)
        f1_loss = 1.0 - jnp.sum(f1, axis=0, keepdims=True) * jnp.float32(1.0 / classes)
        ce_loss = -jnp.sum(ce_acc[...], axis=0, keepdims=True) * jnp.float32(1.0 / n_total)
        out_ref[...] = f1_loss + ce_loss       # (1, 1)


def custom_loss(y_pred, y_true, *, block_cols: int = 8192):
    """y_pred: (N, CLASSES) float, y_true: (N,) int labels. Returns scalar loss."""
    assert y_pred.ndim == 2
    assert y_true.ndim == 1
    n, c = y_pred.shape
    assert c == CLASSES

    # Class dim -> sublanes, batch dim -> lanes (dense vregs for C=18).
    logits_t = jnp.transpose(y_pred)                 # (C, N), dtype preserved
    labels = y_true.astype(jnp.int32).reshape(1, n)  # (1, N)

    if n <= block_cols:
        tm = n                 # single block; last dim == full extent is legal
    else:
        tm = block_cols
        assert tm % 128 == 0, "block_cols must be a multiple of 128"
    grid = (pl.cdiv(n, tm),)

    kernel = functools.partial(
        _custom_loss_kernel,
        n_total=n, block_cols=tm, classes=CLASSES, epsilon=EPSILON)

    out = pl.pallas_call(
        kernel,
        out_shape=jax.ShapeDtypeStruct((1, 1), jnp.float32),
        grid_spec=pltpu.PrefetchScalarGridSpec(
            num_scalar_prefetch=0,
            grid=grid,
            in_specs=[
                pl.BlockSpec((CLASSES, tm), lambda i: (0, i)),  # logits (C, N)
                pl.BlockSpec((1, tm), lambda i: (0, i)),        # labels (1, N)
            ],
            out_specs=pl.BlockSpec((1, 1), lambda i: (0, 0)),
            scratch_shapes=[
                pltpu.VMEM((CLASSES, 1), jnp.float32),  # tp
                pltpu.VMEM((CLASSES, 1), jnp.float32),  # colsum(probs)
                pltpu.VMEM((CLASSES, 1), jnp.float32),  # per-class label count
                pltpu.VMEM((CLASSES, 1), jnp.float32),  # sum(one_hot * log_probs)
            ]),
        compiler_params=pltpu.CompilerParams(
            dimension_semantics=("arbitrary",),        # sequential reduction axis
            vmem_limit_bytes=32 * 1024 * 1024),        # explicit, v7x-safe
    )(logits_t, labels)
    return out[0, 0]


if __name__ == "__main__":
    key = jax.random.PRNGKey(0)
    k1, k2 = jax.random.split(key)
    N = 300  # with block_cols=128: grid of 3 tiles incl. a masked partial tail
    y_pred = jax.random.normal(k1, (N, CLASSES), dtype=jnp.float32)
    y_true = jax.random.randint(k2, (N,), 0, CLASSES, dtype=jnp.int32)

    loss = custom_loss(y_pred, y_true, block_cols=128)
    jax.block_until_ready(loss)

    # Pure-JAX reference (mirrors the PyTorch module).
    def ref_loss(y_pred, y_true):
        one_hot = jax.nn.one_hot(y_true, CLASSES, dtype=jnp.float32)
        log_probs = jax.nn.log_softmax(y_pred, axis=1)
        ce = -jnp.mean(jnp.sum(one_hot * log_probs, axis=1))
        probs = jax.nn.softmax(y_pred, axis=1)
        tp = jnp.sum(one_hot * probs, axis=0)
        fp = jnp.sum((1 - one_hot) * probs, axis=0)
        fn = jnp.sum(one_hot * (1 - probs), axis=0)
        precision = tp / (tp + fp + EPSILON)
        recall = tp / (tp + fn + EPSILON)
        f1 = 2 * precision * recall / (precision + recall + EPSILON)
        f1 = jnp.clip(f1, EPSILON, 1 - EPSILON)
        return (1 - jnp.mean(f1)) + ce

    ref = ref_loss(y_pred, y_true)
    # Tolerance accounts for the approximate (EUP) reciprocal in the softmax.
    assert jnp.allclose(loss, ref, atol=2e-3, rtol=2e-3), (loss, ref)
    print("KERNEL_OK")
</pallas_src>

<mosaic_0001>
module attributes {stable_mosaic.version = 11 : i64} {
  func.func @_custom_loss_kernel(%arg0: i32, %arg1: memref<18x128xf32, #tpu.memory_space<vmem>>, %arg2: memref<1x128xi32, #tpu.memory_space<vmem>>, %arg3: memref<1x1xf32, #tpu.memory_space<vmem>>, %arg4: memref<18x1xf32, #tpu.memory_space<vmem>>, %arg5: memref<18x1xf32, #tpu.memory_space<vmem>>, %arg6: memref<18x1xf32, #tpu.memory_space<vmem>>, %arg7: memref<18x1xf32, #tpu.memory_space<vmem>>) attributes {dimension_semantics = [#tpu.dimension_semantics<arbitrary>], iteration_bounds = array<i64: 3>, scalar_prefetch = 0 : i64, scratch_operands = 4 : i64, tpu.core_type = #tpu.core_type<tc>, window_params = [{transform_indices = @transform_0, window_bounds = array<i64: 18, 128>}, {transform_indices = @transform_1, window_bounds = array<i64: 1, 128>}, {pipeline_mode = #tpu.pipeline_mode<synchronous>, transform_indices = @transform_2, window_bounds = array<i64: 1, 1>}]} {
    %c0_i32 = arith.constant 0 : i32
    %0 = arith.cmpi eq, %arg0, %c0_i32 : i32
    %1 = arith.extui %0 : i1 to i32
    %c0_i32_0 = arith.constant 0 : i32
    %2 = arith.cmpi ne, %1, %c0_i32_0 : i32
    scf.if %2 {
      %cst_29 = arith.constant 0.000000e+00 : f32
      %65 = vector.broadcast %cst_29 : f32 to vector<18x1xf32>
      %c0_30 = arith.constant 0 : index
      %c0_31 = arith.constant 0 : index
      %66 = vector.load %arg4[%c0_30, %c0_31] : memref<18x1xf32, #tpu.memory_space<vmem>>, vector<18x1xf32>
      tpu.vector_store %arg4[%c0_30, %c0_31], %65 {strides = array<i32>} : memref<18x1xf32, #tpu.memory_space<vmem>>, vector<18x1xf32>,
      %cst_32 = arith.constant 0.000000e+00 : f32
      %67 = vector.broadcast %cst_32 : f32 to vector<18x1xf32>
      %c0_33 = arith.constant 0 : index
      %c0_34 = arith.constant 0 : index
      %68 = vector.load %arg5[%c0_33, %c0_34] : memref<18x1xf32, #tpu.memory_space<vmem>>, vector<18x1xf32>
      tpu.vector_store %arg5[%c0_33, %c0_34], %67 {strides = array<i32>} : memref<18x1xf32, #tpu.memory_space<vmem>>, vector<18x1xf32>,
      %cst_35 = arith.constant 0.000000e+00 : f32
      %69 = vector.broadcast %cst_35 : f32 to vector<18x1xf32>
      %c0_36 = arith.constant 0 : index
      %c0_37 = arith.constant 0 : index
      %70 = vector.load %arg6[%c0_36, %c0_37] : memref<18x1xf32, #tpu.memory_space<vmem>>, vector<18x1xf32>
      tpu.vector_store %arg6[%c0_36, %c0_37], %69 {strides = array<i32>} : memref<18x1xf32, #tpu.memory_space<vmem>>, vector<18x1xf32>,
      %cst_38 = arith.constant 0.000000e+00 : f32
      %71 = vector.broadcast %cst_38 : f32 to vector<18x1xf32>
      %c0_39 = arith.constant 0 : index
      %c0_40 = arith.constant 0 : index
      %72 = vector.load %arg7[%c0_39, %c0_40] : memref<18x1xf32, #tpu.memory_space<vmem>>, vector<18x1xf32>
      tpu.vector_store %arg7[%c0_39, %c0_40], %71 {strides = array<i32>} : memref<18x1xf32, #tpu.memory_space<vmem>>, vector<18x1xf32>,
    } else {
    }
    %c0 = arith.constant 0 : index
    %c0_1 = arith.constant 0 : index
    %3 = vector.load %arg1[%c0, %c0_1] : memref<18x128xf32, #tpu.memory_space<vmem>>, vector<18x128xf32>
    %c0_2 = arith.constant 0 : index
    %c0_3 = arith.constant 0 : index
    %4 = vector.load %arg2[%c0_2, %c0_3] : memref<1x128xi32, #tpu.memory_space<vmem>>, vector<1x128xi32>
    %c128_i32 = arith.constant 128 : i32
    %5 = arith.muli %arg0, %c128_i32 : i32
    %6 = tpu.iota {dimensions = array<i32: 1>} : vector<1x128xi32>
    %7 = vector.broadcast %5 : i32 to vector<1x128xi32>
    %8 = arith.addi %7, %6 : vector<1x128xi32>
    %c300_i32 = arith.constant 300 : i32
    %9 = vector.broadcast %c300_i32 : i32 to vector<1x128xi32>
    %10 = arith.cmpi slt, %8, %9 : vector<1x128xi32>
    %11 = arith.extui %10 : vector<1x128xi1> to vector<1x128xi32>
    %12 = arith.sitofp %11 : vector<1x128xi32> to vector<1x128xf32>
    %cst = arith.constant 0.000000e+00 : f32
    %13 = vector.shape_cast %10 : vector<1x128xi1> to vector<1x128xi1>
    %14 = vector.broadcast %13 : vector<1x128xi1> to vector<18x128xi1>
    %15 = vector.broadcast %cst : f32 to vector<18x128xf32>
    %16 = arith.select %14, %3, %15 : vector<18x128xi1>, vector<18x128xf32>
    %17 = tpu.iota {dimensions = array<i32: 0>} : vector<18x128xi32>
    %18 = vector.broadcast %4 : vector<1x128xi32> to vector<18x128xi32>
    %19 = arith.cmpi eq, %18, %17 : vector<18x128xi32>
    %20 = vector.broadcast %10 : vector<1x128xi1> to vector<18x128xi1>
    %21 = arith.andi %19, %20 : vector<18x128xi1>
    %cst_4 = arith.constant 1.000000e+00 : f32
    %cst_5 = arith.constant 0.000000e+00 : f32
    %22 = vector.broadcast %cst_4 : f32 to vector<18x128xf32>
    %23 = vector.broadcast %cst_5 : f32 to vector<18x128xf32>
    %24 = arith.select %21, %22, %23 : vector<18x128xi1>, vector<18x128xf32>
    %cst_6 = arith.constant dense<0xFF800000> : vector<128xf32>
    %25 = vector.multi_reduction <maximumf>, %16, %cst_6 [0] : vector<18x128xf32> to vector<128xf32>
    %26 = vector.shape_cast %25 : vector<128xf32> to vector<1x128xf32>
    %27 = vector.broadcast %26 : vector<1x128xf32> to vector<18x128xf32>
    %28 = arith.subf %16, %27 : vector<18x128xf32>
    %29 = math.exp %28 : vector<18x128xf32>
    %cst_7 = arith.constant dense<0.000000e+00> : vector<128xf32>
    %30 = vector.multi_reduction <add>, %29, %cst_7 [0] : vector<18x128xf32> to vector<128xf32>
    %31 = vector.shape_cast %30 : vector<128xf32> to vector<1x128xf32>
    %32 = tpu.reciprocal %31 {approx = true} : vector<1x128xf32> -> vector<1x128xf32>
    %33 = vector.broadcast %32 : vector<1x128xf32> to vector<18x128xf32>
    %34 = arith.mulf %29, %33 : vector<18x128xf32>
    %35 = math.log %31 : vector<1x128xf32>
    %36 = vector.broadcast %35 : vector<1x128xf32> to vector<18x128xf32>
    %37 = arith.subf %28, %36 : vector<18x128xf32>
    %c0_8 = arith.constant 0 : index
    %c0_9 = arith.constant 0 : index
    %38 = vector.load %arg4[%c0_8, %c0_9] : memref<18x1xf32, #tpu.memory_space<vmem>>, vector<18x1xf32>
    %39 = arith.mulf %24, %34 : vector<18x128xf32>
    %cst_10 = arith.constant dense<0.000000e+00> : vector<18xf32>
    %40 = vector.multi_reduction <add>, %39, %cst_10 [1] : vector<18x128xf32> to vector<18xf32>
    %41 = vector.shape_cast %40 : vector<18xf32> to vector<18x1xf32>
    %42 = arith.addf %38, %41 : vector<18x1xf32>
    %c0_11 = arith.constant 0 : index
    %c0_12 = arith.constant 0 : index
    %43 = vector.load %arg4[%c0_11, %c0_12] : memref<18x1xf32, #tpu.memory_space<vmem>>, vector<18x1xf32>
    tpu.vector_store %arg4[%c0_11, %c0_12], %42 {strides = array<i32>} : memref<18x1xf32, #tpu.memory_space<vmem>>, vector<18x1xf32>,
    %c0_13 = arith.constant 0 : index
    %c0_14 = arith.constant 0 : index
    %44 = vector.load %arg5[%c0_13, %c0_14] : memref<18x1xf32, #tpu.memory_space<vmem>>, vector<18x1xf32>
    %45 = vector.broadcast %12 : vector<1x128xf32> to vector<18x128xf32>
    %46 = arith.mulf %34, %45 : vector<18x128xf32>
    %cst_15 = arith.constant dense<0.000000e+00> : vector<18xf32>
    %47 = vector.multi_reduction <add>, %46, %cst_15 [1] : vector<18x128xf32> to vector<18xf32>
    %48 = vector.shape_cast %47 : vector<18xf32> to vector<18x1xf32>
    %49 = arith.addf %44, %48 : vector<18x1xf32>
    %c0_16 = arith.constant 0 : index
    %c0_17 = arith.constant 0 : index
    %50 = vector.load %arg5[%c0_16, %c0_17] : memref<18x1xf32, #tpu.memory_space<vmem>>, vector<18x1xf32>
    tpu.vector_store %arg5[%c0_16, %c0_17], %49 {strides = array<i32>} : memref<18x1xf32, #tpu.memory_space<vmem>>, vector<18x1xf32>,
    %c0_18 = arith.constant 0 : index
    %c0_19 = arith.constant 0 : index
    %51 = vector.load %arg6[%c0_18, %c0_19] : memref<18x1xf32, #tpu.memory_space<vmem>>, vector<18x1xf32>
    %cst_20 = arith.constant dense<0.000000e+00> : vector<18xf32>
    %52 = vector.multi_reduction <add>, %24, %cst_20 [1] : vector<18x128xf32> to vector<18xf32>
    %53 = vector.shape_cast %52 : vector<18xf32> to vector<18x1xf32>
    %54 = arith.addf %51, %53 : vector<18x1xf32>
    %c0_21 = arith.constant 0 : index
    %c0_22 = arith.constant 0 : index
    %55 = vector.load %arg6[%c0_21, %c0_22] : memref<18x1xf32, #tpu.memory_space<vmem>>, vector<18x1xf32>
    tpu.vector_store %arg6[%c0_21, %c0_22], %54 {strides = array<i32>} : memref<18x1xf32, #tpu.memory_space<vmem>>, vector<18x1xf32>,
    %c0_23 = arith.constant 0 : index
    %c0_24 = arith.constant 0 : index
    %56 = vector.load %arg7[%c0_23, %c0_24] : memref<18x1xf32, #tpu.memory_space<vmem>>, vector<18x1xf32>
    %57 = arith.mulf %24, %37 : vector<18x128xf32>
    %cst_25 = arith.constant dense<0.000000e+00> : vector<18xf32>
    %58 = vector.multi_reduction <add>, %57, %cst_25 [1] : vector<18x128xf32> to vector<18xf32>
    %59 = vector.shape_cast %58 : vector<18xf32> to vector<18x1xf32>
    %60 = arith.addf %56, %59 : vector<18x1xf32>
    %c0_26 = arith.constant 0 : index
    %c0_27 = arith.constant 0 : index
    %61 = vector.load %arg7[%c0_26, %c0_27] : memref<18x1xf32, #tpu.memory_space<vmem>>, vector<18x1xf32>
    tpu.vector_store %arg7[%c0_26, %c0_27], %60 {strides = array<i32>} : memref<18x1xf32, #tpu.memory_space<vmem>>, vector<18x1xf32>,
    %c2_i32 = arith.constant 2 : i32
    %62 = arith.cmpi eq, %arg0, %c2_i32 : i32
    %63 = arith.extui %62 : i1 to i32
    %c0_i32_28 = arith.constant 0 : i32
    %64 = arith.cmpi ne, %63, %c0_i32_28 : i32
    scf.if %64 {
      %c0_29 = arith.constant 0 : index
      %c0_30 = arith.constant 0 : index
      %65 = vector.load %arg4[%c0_29, %c0_30] : memref<18x1xf32, #tpu.memory_space<vmem>>, vector<18x1xf32>
      %c0_31 = arith.constant 0 : index
      %c0_32 = arith.constant 0 : index
      %66 = vector.load %arg5[%c0_31, %c0_32] : memref<18x1xf32, #tpu.memory_space<vmem>>, vector<18x1xf32>
      %67 = arith.subf %66, %65 : vector<18x1xf32>
      %c0_33 = arith.constant 0 : index
      %c0_34 = arith.constant 0 : index
      %68 = vector.load %arg6[%c0_33, %c0_34] : memref<18x1xf32, #tpu.memory_space<vmem>>, vector<18x1xf32>
      %69 = arith.subf %68, %65 : vector<18x1xf32>
      %70 = arith.addf %65, %67 : vector<18x1xf32>
      %cst_35 = arith.constant 1.000000e-07 : f32
      %71 = vector.broadcast %cst_35 : f32 to vector<18x1xf32>
      %72 = arith.addf %70, %71 : vector<18x1xf32>
      %73 = arith.divf %65, %72 : vector<18x1xf32>
      %74 = arith.addf %65, %69 : vector<18x1xf32>
      %cst_36 = arith.constant 1.000000e-07 : f32
      %75 = vector.broadcast %cst_36 : f32 to vector<18x1xf32>
      %76 = arith.addf %74, %75 : vector<18x1xf32>
      %77 = arith.divf %65, %76 : vector<18x1xf32>
      %cst_37 = arith.constant 2.000000e+00 : f32
      %78 = vector.broadcast %cst_37 : f32 to vector<18x1xf32>
      %79 = arith.mulf %78, %73 : vector<18x1xf32>
      %80 = arith.mulf %79, %77 : vector<18x1xf32>
      %81 = arith.addf %73, %77 : vector<18x1xf32>
      %cst_38 = arith.constant 1.000000e-07 : f32
      %82 = vector.broadcast %cst_38 : f32 to vector<18x1xf32>
      %83 = arith.addf %81, %82 : vector<18x1xf32>
      %84 = arith.divf %80, %83 : vector<18x1xf32>
      %cst_39 = arith.constant 1.000000e+00 : f32
      %cst_40 = arith.constant 1.000000e-07 : f32
      %85 = arith.subf %cst_39, %cst_40 : f32
      %cst_41 = arith.constant 1.000000e-07 : f32
      %86 = vector.broadcast %cst_41 : f32 to vector<18x1xf32>
      %87 = arith.maximumf %86, %84 : vector<18x1xf32>
      %88 = vector.broadcast %85 : f32 to vector<18x1xf32>
      %89 = arith.minimumf %88, %87 : vector<18x1xf32>
      %cst_42 = arith.constant dense<0.000000e+00> : vector<1xf32>
      %90 = vector.multi_reduction <add>, %89, %cst_42 [0] : vector<18x1xf32> to vector<1xf32>
      %91 = vector.shape_cast %90 : vector<1xf32> to vector<1x1xf32>
      %cst_43 = arith.constant 0.055555556 : f32
      %92 = vector.broadcast %cst_43 : f32 to vector<1x1xf32>
      %93 = arith.mulf %91, %92 : vector<1x1xf32>
      %cst_44 = arith.constant 1.000000e+00 : f32
      %94 = vector.broadcast %cst_44 : f32 to vector<1x1xf32>
      %95 = arith.subf %94, %93 : vector<1x1xf32>
      %c0_45 = arith.constant 0 : index
      %c0_46 = arith.constant 0 : index
      %96 = vector.load %arg7[%c0_45, %c0_46] : memref<18x1xf32, #tpu.memory_space<vmem>>, vector<18x1xf32>
      %cst_47 = arith.constant dense<0.000000e+00> : vector<1xf32>
      %97 = vector.multi_reduction <add>, %96, %cst_47 [0] : vector<18x1xf32> to vector<1xf32>
      %98 = vector.shape_cast %97 : vector<1xf32> to vector<1x1xf32>
      %cst_48 = arith.constant 0.000000e+00 : f32
      %99 = vector.broadcast %cst_48 : f32 to vector<1x1xf32>
      %100 = arith.subf %99, %98 : vector<1x1xf32>
      %cst_49 = arith.constant 0.00333333341 : f32
      %101 = vector.broadcast %cst_49 : f32 to vector<1x1xf32>
      %102 = arith.mulf %100, %101 : vector<1x1xf32>
      %103 = arith.addf %95, %102 : vector<1x1xf32>
      %c0_50 = arith.constant 0 : index
      %c0_51 = arith.constant 0 : index
      %104 = vector.load %arg3[%c0_50, %c0_51] : memref<1x1xf32, #tpu.memory_space<vmem>>, vector<1x1xf32>
      tpu.vector_store %arg3[%c0_50, %c0_51], %103 {strides = array<i32>} : memref<1x1xf32, #tpu.memory_space<vmem>>, vector<1x1xf32>,
    } else {
    }
    return
  }
  func.func @transform_0(%arg0: i32) -> (i32, i32) {
    %c0_i32 = arith.constant 0 : i32
    %c0_i32_0 = arith.constant 0 : i32
    return %c0_i32, %arg0 : i32, i32
  }
  func.func @transform_1(%arg0: i32) -> (i32, i32) {
    %c0_i32 = arith.constant 0 : i32
    %c0_i32_0 = arith.constant 0 : i32
    return %c0_i32, %arg0 : i32, i32
  }
  func.func @transform_2(%arg0: i32) -> (i32, i32) {
    %c0_i32 = arith.constant 0 : i32
    %c0_i32_0 = arith.constant 0 : i32
    %c0_i32_1 = arith.constant 0 : i32
    return %c0_i32, %c0_i32_0 : i32, i32
  }
}

</mosaic_0001>

<llo_original>
// kernel: tpu_custom_call.1
$region0: #{tpu_custom_call.1}
  #allocation0 [shape = 'u32[]', space=smem, size = 0x4, offset = 0x4, fixed_abs, tag = 'smem constant byte address 0x4 - core index']
  #allocation1 [shape = 'u32[144,128]{1,0:T(1,128)}', space=vmem, size = 0x12000, scoped, tag = 'internal scratch']
  #allocation2 [shape = 'f32[18,1]{1,0:T(8,128)}', space=vmem, size = 0x3000, scoped, tag = 'scratch operand']
  #allocation3 [shape = 'f32[18,1]{1,0:T(8,128)}', space=vmem, size = 0x3000, scoped, tag = 'scratch operand']
  #allocation4 [shape = 'f32[18,1]{1,0:T(8,128)}', space=vmem, size = 0x3000, scoped, tag = 'scratch operand']
  #allocation5 [shape = 'f32[18,1]{1,0:T(8,128)}', space=vmem, size = 0x3000, scoped, tag = 'scratch operand']
  %s0 = inlined_call_operand.hbm [shape: f32[18,300], index: 0, kind: input, shape index: {}]
  %s1 = inlined_call_operand.vmem [shape: s32[1,300], index: 1, kind: input, shape index: {}]
  %s2 = inlined_call_operand.hbm [shape: f32[1,1], index: 2, kind: output, shape index: {}]
  %s3 = sld [smem:[#allocation0]]
  $region53: #{tpu_custom_call.1} parent=0
    _
  %s5 = ssub.s32 1, %s3
  %s6 = scalar_select 0, %s5, %s3
  $region1: #{tpu_custom_call.1} parent=0
    #allocation6 [shape = 'u8[24576]{0}', space=vmem, size = 0x6000, scoped, tag = 'input window, operand 0']
    #allocation7 [shape = 's32[2]{0}', space=sflag, size = 0x8, scoped, tag = 'scoped memory for tpu_custom_call.1']
    #allocation8 [shape = 's32[2]{0}', space=sflag, size = 0x8, scoped, tag = 'scoped memory for tpu_custom_call.1']
    #allocation9 [shape = 'u8[512]{0}', space=vmem, size = 0x400, scoped, tag = 'output window, operand 0, single buffered']
    %7 = vsyncpa [#allocation7], 0
    %s8 = scalar_lea.sflag [#allocation7], 1
    %9 = vsyncpa %s8, 0
    %10 = vsyncpa [#allocation8], 0
    loop: start=0, step=1, limit=5
    $region2: #{tpu_custom_call.1} parent=1 // loop_pre_header
      _
    $region3: #{tpu_custom_call.1} parent=1 // loop_header
      %s12 = sphi 0, %s16
      %p13 = scmp.ge.s32.totalorder %s12, 5
      %s22 = sphi 0, %s24
      %s25 = sphi 0, %s22
      %s26 = sphi 0, %s25
      %s42 = sphi 0, %s26
      %s48 = sphi 0, %s50
      %s51 = sphi 0, %s48
      %s52 = sphi 0, %s51
      %s68 = sphi 0, %s52
      %s72 = sphi 0, %s72
      %s74 = sphi 0, %s72
      %s75 = sphi 0, %s74
      %s89 = sphi 0, %s75
    $region4: #{tpu_custom_call.1} parent=1 // loop_header_branch
      %15 = sbr.rel (%p13) target = $region8
    $region5: #{tpu_custom_call.1} parent=1 // loop_body
      %s17 = ssub.s32 %s12, 1
      %s18 = ssub.s32 %s12, 2
      %s19 = sadd.s32 %s12, 1
      %s20 = ssub.s32 %s12, %s19
      %p21 = scmp.eq.s32.totalorder %s20, 0
      %s23 = sadd.s32 %s22, 1
      %s24 = scalar_select %p21, %s22, %s23
      %p27 = pneg %p21
      %p28 = scmp.eq.s32.totalorder %s12, 2
      %p29 = por %p27, %p28
      %p30 = scmp.ne.s32.totalorder %s22, %s25
      %p31 = scmp.eq.s32.totalorder %s12, 0
      %p32 = por %p30, %p31
      %p33 = scmp.ne.s32.totalorder %s22, %s25
      %p34 = scmp.eq.s32.totalorder %s17, 2
      %p35 = por %p33, %p34
      %p36 = scmp.ne.s32.totalorder %s25, %s26
      %p37 = scmp.eq.s32.totalorder %s17, 0
      %p38 = por %p36, %p37
      %p39 = scmp.ne.s32.totalorder %s25, %s26
      %p40 = scmp.eq.s32.totalorder %s18, 2
      %p41 = por %p39, %p40
      %p43 = scmp.ne.s32.totalorder %s26, %s42
      %p44 = scmp.eq.s32.totalorder %s18, 0
      %p45 = por %p43, %p44
      %s46 = ssub.s32 %s12, %s19
      %p47 = scmp.eq.s32.totalorder %s46, 0
      %s49 = sadd.s32 %s48, 1
      %s50 = scalar_select %p47, %s48, %s49
      %p53 = pneg %p47
      %p54 = scmp.eq.s32.totalorder %s12, 2
      %p55 = por %p53, %p54
      %p56 = scmp.ne.s32.totalorder %s48, %s51
      %p57 = scmp.eq.s32.totalorder %s12, 0
      %p58 = por %p56, %p57
      %p59 = scmp.ne.s32.totalorder %s48, %s51
      %p60 = scmp.eq.s32.totalorder %s17, 2
      %p61 = por %p59, %p60
      %p62 = scmp.ne.s32.totalorder %s51, %s52
      %p63 = scmp.eq.s32.totalorder %s17, 0
      %p64 = por %p62, %p63
      %p65 = scmp.ne.s32.totalorder %s51, %s52
      %p66 = scmp.eq.s32.totalorder %s18, 2
      %p67 = por %p65, %p66
      %p69 = scmp.ne.s32.totalorder %s52, %s68
      %p70 = scmp.eq.s32.totalorder %s18, 0
      %p71 = por %p69, %p70
      %s73 = sadd.s32 %s72, 1
      %p76 = scmp.eq.s32.totalorder %s12, 2
      %p77 = scmp.ne.s32.totalorder %s72, %s74
      %p78 = scmp.eq.s32.totalorder %s12, 0
      %p79 = por %p77, %p78
      %p80 = scmp.ne.s32.totalorder %s72, %s74
      %p81 = scmp.eq.s32.totalorder %s17, 2
      %p82 = por %p80, %p81
      %p83 = scmp.ne.s32.totalorder %s74, %s75
      %p84 = scmp.eq.s32.totalorder %s17, 0
      %p85 = por %p83, %p84
      %p86 = scmp.ne.s32.totalorder %s74, %s75
      %p87 = scmp.eq.s32.totalorder %s18, 2
      %p88 = por %p86, %p87
      %p90 = scmp.ne.s32.totalorder %s75, %s89
      %p91 = scmp.eq.s32.totalorder %s18, 0
      %p92 = por %p90, %p91
      %p93 = scmp.le.s32.totalorder 1, %s12
      %p94 = scmp.lt.s32.totalorder %s12, 4
      %p95 = pnand %p93, %p94
      %p96 = pneg %p95
      // Predicated region
      $region9: #{tpu_custom_call.1} parent=5 // pred_check
        _
      $region10: #{tpu_custom_call.1} parent=5 // pred_check_branch
        %98 = sbr.rel (%p95) target = $region12
      $region11: #{tpu_custom_call.1} parent=5 // pred_region
        %s99 = ssub.s32 %s12, 1
      $region12: #{tpu_custom_call.1} parent=5 // pred_fallthru
        _
      %p100 = scmp.lt.s32.totalorder %s12, 3
      // Predicated region
      $region13: #{tpu_custom_call.1} parent=5 // pred_check
        %p101 = pneg %p100
      $region14: #{tpu_custom_call.1} parent=5 // pred_check_branch
        %103 = sbr.rel (%p101) target = $region16
      $region15: #{tpu_custom_call.1} parent=5 // pred_region
        // Predicated region
        $region17: #{tpu_custom_call.1} parent=15 // pred_check
          %p104 = pneg %p32
        $region18: #{tpu_custom_call.1} parent=15 // pred_check_branch
          %106 = sbr.rel (%p104) target = $region20
        $region19: #{tpu_custom_call.1} parent=15 // pred_region
          %s107 = sand.u32 %s22, 1
          %s108 = scalar_lea.sflag [#allocation7], %s107
          %s109 = sand.u32 %s22, 1
          %s110 = smul.addr %s109, 24
          %s111 = scalar_lea.vmem [#allocation6], %s110
          %s113 = ssub.s32 384, 384
          %114 = vsyncadd %s108, %s113
          %s115 = smul.addr %s12, 128
          %s116 = scalar_lea.hbm %s0, %s115
          %s117 = sshll.u32 %s111, 4
          %s118 = int_to_ptr.vmem [resolvable:$true] %s117
          %123 = dma.hbm_to_vmem [thread:$0]  %s116, 384, %s118, %s108, 384, 128, 8
        $region20: #{tpu_custom_call.1} parent=15 // pred_fallthru
          _
        // Predicated region
        $region21: #{tpu_custom_call.1} parent=15 // pred_check
          %p124 = pneg %p58
        $region22: #{tpu_custom_call.1} parent=15 // pred_check_branch
          %126 = sbr.rel (%p124) target = $region24
        $region23: #{tpu_custom_call.1} parent=15 // pred_region
          %p127 = scmp.lt.s32.totalorder %s12, 2
          %s128 = scalar_select %p127, %s12, 2
          %s129 = scalar_lea.vmem %s1, %s128
        $region24: #{tpu_custom_call.1} parent=15 // pred_fallthru
          _
      $region16: #{tpu_custom_call.1} parent=5 // pred_fallthru
        _
      %p130 = scmp.le.s32.totalorder 1, %s12
      %p131 = scmp.lt.s32.totalorder %s12, 4
      %p132 = pnand %p130, %p131
      %p133 = pneg %p132
      // Predicated region
      $region25: #{tpu_custom_call.1} parent=5 // pred_check
        _
      $region26: #{tpu_custom_call.1} parent=5 // pred_check_branch
        %135 = sbr.rel (%p132) target = $region28
      $region27: #{tpu_custom_call.1} parent=5 // pred_region
        %s136 = ssub.s32 %s12, 1
        %s137 = sand.u32 %s25, 1
        %s138 = scalar_lea.sflag [#allocation7], %s137
        %s139 = sand.u32 %s25, 1
        %s140 = smul.addr %s139, 24
        %s141 = scalar_lea.vmem [#allocation6], %s140
        // Predicated region
        $region29: #{tpu_custom_call.1} parent=27 // pred_check
          %p142 = pneg %p38
        $region30: #{tpu_custom_call.1} parent=27 // pred_check_branch
          %144 = sbr.rel (%p142) target = $region32
        $region31: #{tpu_custom_call.1} parent=27 // pred_region
          %145 = dma.done %s138, 384
        $region32: #{tpu_custom_call.1} parent=27 // pred_fallthru
          _
        %s146 = sand.u32 %s25, 1
        %s147 = scalar_lea.sflag [#allocation7], %s146
        %s148 = sand.u32 %s25, 1
        %s149 = smul.addr %s148, 24
        %s150 = scalar_lea.vmem [#allocation6], %s149
        %p151 = pneg %p38
        %p152 = pneg %p35
        %p153 = scmp.lt.s32.totalorder %s17, 2
        %s154 = scalar_select %p153, %s17, 2
        %s155 = scalar_lea.vmem %s1, %s154
        %p156 = pneg %p64
        %p157 = pneg %p61
        %p158 = pneg %p85
        %p159 = pneg %p82
        %p160 = scmp.lt.s32.totalorder %s17, 2
        %s161 = scalar_select %p160, %s17, 2
        %s162 = scalar_lea.vmem %s1, %s161
        %p163 = scmp.eq.s32.totalorder %s17, 0
        // Predicated region
        $region33: #{tpu_custom_call.1} parent=27 // pred_check
          %p164 = pneg %p163
        $region34: #{tpu_custom_call.1} parent=27 // pred_check_branch
          %166 = sbr.rel (%p164) target = $region36
        $region35: #{tpu_custom_call.1} parent=27 // pred_region
          %vm167 = vcmask 7168
          %168 = vst.msk [vmem:[#allocation2] sm:$0xff] %vm167, 0.0
          %169 = vst.msk [vmem:[#allocation2 + $0x8] sm:$0xff] %vm167, 0.0
          %vm170 = vcmask 1024
          %171 = vst.msk [vmem:[#allocation2 + $0x10] sm:$0x3] %vm170, 0.0
          %172 = vst.msk [vmem:[#allocation3] sm:$0xff] %vm167, 0.0
          %173 = vst.msk [vmem:[#allocation3 + $0x8] sm:$0xff] %vm167, 0.0
          %174 = vst.msk [vmem:[#allocation3 + $0x10] sm:$0x3] %vm170, 0.0
          %175 = vst.msk [vmem:[#allocation4] sm:$0xff] %vm167, 0.0
          %176 = vst.msk [vmem:[#allocation4 + $0x8] sm:$0xff] %vm167, 0.0
          %177 = vst.msk [vmem:[#allocation4 + $0x10] sm:$0x3] %vm170, 0.0
          %178 = vst.msk [vmem:[#allocation5] sm:$0xff] %vm167, 0.0
          %179 = vst.msk [vmem:[#allocation5 + $0x8] sm:$0xff] %vm167, 0.0
          %180 = vst.msk [vmem:[#allocation5 + $0x10] sm:$0x3] %vm170, 0.0
        $region36: #{tpu_custom_call.1} parent=27 // pred_fallthru
          _
        %v181 = vld [vmem:[%s141] sm:$0xff]
        %v182 = vld [vmem:[%s141 + $0x8] sm:$0xff]
        %v183 = vld [vmem:[%s141 + $0x10] sm:$0x3]
        %v184 = vld [vmem:[%s162] sm:$0x1]
        %s185 = smul.u32 %s17, 128
        %v186 = vlaneseq
        %v187 = vand.u32 %v186, 127
        %v188 = vstv %s185
        %v189 = vadd.s32 %v188, %v187
        %vm190 = vcmp.lt.s32.totalorder %v189, 300
        %v191 = vsel %vm190, 1, 0
        %v192 = vcvt.s32.f32 %v191
        %vm193 = vcmp.eq.s32.totalorder %v191, 1
        %v194 = vsel %vm193, %v181, 0.0
        %v195 = vsel %vm193, %v182, 0.0
        %v196 = vsel %vm193, %v183, 0.0
        %v197 = vlaneseq
        %v198 = vshrl.u32 %v197, 7
        %v199 = vadd.s32 %v198, 8
        %v200 = vadd.s32 %v198, 16
        %v201 = vlaneseq
        %v202 = vshrl.u32 %v201, 7
        %v203 = vsub.s32 0, %v202
        %v204 = vrot.slane %v184, %v203
        %vm205 = vcmp.eq.s32.totalorder %v204, %v198
        %vm206 = vcmp.eq.s32.totalorder %v204, %v199
        %vm207 = vcmp.eq.s32.totalorder %v204, %v200
        %vm208 = vmand %vm205, %vm193
        %vm209 = vmand %vm206, %vm193
        %vm210 = vmand %vm207, %vm193
        %v211 = vsel %vm208, 1.0, 0.0
        %v212 = vsel %vm209, 1.0, 0.0
        %v213 = vsel %vm210, 1.0, 0.0
        %vm214 = vcmask 1041408
        %v215 = vsel %vm214, %v196, -inf
        %v216 = vmax.f32 %v194, %v195
        %v217 = vmax.f32 %v216, %v215
        %v218 = vrot.slane %v217, 4
        %v219 = vmax.f32 %v217, %v218
        %v220 = vrot.slane %v219, 2
        %v221 = vmax.f32 %v219, %v220
        %v222 = vrot.slane %v221, 1
        %v223 = vmax.f32 %v221, %v222
        %v224 = vsub.f32 %v194, %v223
        %v225 = vsub.f32 %v195, %v223
        %v226 = vsub.f32 %v196, %v223
        %v227 = vmul.f32 %v224, 1.442695
        %v228 = vpow.pop %v227
        %v229 = vmul.f32 %v225, 1.442695
        %v230 = vpow.pop %v229
        %v231 = vmul.f32 %v226, 1.442695
        %v232 = vpow.pop %v231
        %v233 = vadd.f32 %v228, %v230
        %v234 = vsel %vm214, %v232, 0.0
        %v235 = vadd.f32 %v233, %v234
        %v236 = vrot.slane %v235, 4
        %v237 = vadd.f32 %v235, %v236
        %v238 = vrot.slane %v237, 2
        %v239 = vadd.f32 %v237, %v238
        %v240 = vrot.slane %v239, 1
        %v241 = vadd.f32 %v239, %v240
        %v242 = vrcp.pop %v241
        %v243 = vmul.f32 %v228, %v242
        %v244 = vmul.f32 %v230, %v242
        %v245 = vmul.f32 %v232, %v242
        %v246 = vlog2.pop %v241
        %v247 = vmul.f32 %v246, 0.6931472
        %v248 = vsub.f32 %v224, %v247
        %v249 = vsub.f32 %v225, %v247
        %v250 = vsub.f32 %v226, %v247
        %v251 = vld [vmem:[#allocation2] sm:$0xff]
        %v252 = vld [vmem:[#allocation2 + $0x8] sm:$0xff]
        %v253 = vld [vmem:[#allocation2 + $0x10] sm:$0x3]
        %v254 = vmul.f32 %v211, %v243
        %v255 = vmul.f32 %v212, %v244
        %v256 = vmul.f32 %v213, %v245
        %257 = vadd.xlane.f32.xlu0 %v254
        %v258 = vpop.xlane.xlu0 %257
        %259 = vadd.xlane.f32.xlu0 %v255
        %v260 = vpop.xlane.xlu0 %259
        %v261 = vsel %vm214, %v256, 0.0
        %262 = vadd.xlane.f32.xlu0 %v261
        %v263 = vpop.xlane.xlu0 %262
        %v264 = vadd.f32 %v251, %v258
        %v265 = vadd.f32 %v252, %v260
        %v266 = vadd.f32 %v253, %v263
        %vm267 = vcmask 7168
        %268 = vst.msk [vmem:[#allocation2] sm:$0xff] %vm267, %v264
        %269 = vst.msk [vmem:[#allocation2 + $0x8] sm:$0xff] %vm267, %v265
        %vm270 = vcmask 1024
        %271 = vst.msk [vmem:[#allocation2 + $0x10] sm:$0x3] %vm270, %v266
        %v272 = vld [vmem:[#allocation3] sm:$0xff]
        %v273 = vld [vmem:[#allocation3 + $0x8] sm:$0xff]
        %v274 = vld [vmem:[#allocation3 + $0x10] sm:$0x3]
        %v275 = vmul.f32 %v243, %v192
        %v276 = vmul.f32 %v244, %v192
        %v277 = vmul.f32 %v245, %v192
        %278 = vadd.xlane.f32.xlu0 %v275
        %v279 = vpop.xlane.xlu0 %278
        %280 = vadd.xlane.f32.xlu0 %v276
        %v281 = vpop.xlane.xlu0 %280
        %v282 = vsel %vm214, %v277, 0.0
        %283 = vadd.xlane.f32.xlu0 %v282
        %v284 = vpop.xlane.xlu0 %283
        %v285 = vadd.f32 %v272, %v279
        %v286 = vadd.f32 %v273, %v281
        %v287 = vadd.f32 %v274, %v284
        %288 = vst.msk [vmem:[#allocation3] sm:$0xff] %vm267, %v285
        %289 = vst.msk [vmem:[#allocation3 + $0x8] sm:$0xff] %vm267, %v286
        %290 = vst.msk [vmem:[#allocation3 + $0x10] sm:$0x3] %vm270, %v287
        %v291 = vld [vmem:[#allocation4] sm:$0xff]
        %v292 = vld [vmem:[#allocation4 + $0x8] sm:$0xff]
        %v293 = vld [vmem:[#allocation4 + $0x10] sm:$0x3]
        %294 = vadd.xlane.f32.xlu0 %v211
        %v295 = vpop.xlane.xlu0 %294
        %296 = vadd.xlane.f32.xlu0 %v212
        %v297 = vpop.xlane.xlu0 %296
        %v298 = vsel %vm214, %v213, 0.0
        %299 = vadd.xlane.f32.xlu0 %v298
        %v300 = vpop.xlane.xlu0 %299
        %v301 = vadd.f32 %v291, %v295
        %v302 = vadd.f32 %v292, %v297
        %v303 = vadd.f32 %v293, %v300
        %304 = vst.msk [vmem:[#allocation4] sm:$0xff] %vm267, %v301
        %305 = vst.msk [vmem:[#allocation4 + $0x8] sm:$0xff] %vm267, %v302
        %306 = vst.msk [vmem:[#allocation4 + $0x10] sm:$0x3] %vm270, %v303
        %v307 = vld [vmem:[#allocation5] sm:$0xff]
        %v308 = vld [vmem:[#allocation5 + $0x8] sm:$0xff]
        %v309 = vld [vmem:[#allocation5 + $0x10] sm:$0x3]
        %v310 = vmul.f32 %v211, %v248
        %v311 = vmul.f32 %v212, %v249
        %v312 = vmul.f32 %v213, %v250
        %313 = vadd.xlane.f32.xlu0 %v310
        %v314 = vpop.xlane.xlu0 %313
        %315 = vadd.xlane.f32.xlu0 %v311
        %v316 = vpop.xlane.xlu0 %315
        %v317 = vsel %vm214, %v312, 0.0
        %318 = vadd.xlane.f32.xlu0 %v317
        %v319 = vpop.xlane.xlu0 %318
        %v320 = vadd.f32 %v307, %v314
        %v321 = vadd.f32 %v308, %v316
        %v322 = vadd.f32 %v309, %v319
        %323 = vst.msk [vmem:[#allocation5] sm:$0xff] %vm267, %v320
        %324 = vst.msk [vmem:[#allocation5 + $0x8] sm:$0xff] %vm267, %v321
        %325 = vst.msk [vmem:[#allocation5 + $0x10] sm:$0x3] %vm270, %v322
        %p326 = scmp.eq.s32.totalorder %s17, 2
        // Predicated region
        $region37: #{tpu_custom_call.1} parent=27 // pred_check
          %p327 = pneg %p326
        $region38: #{tpu_custom_call.1} parent=27 // pred_check_branch
          %329 = sbr.rel (%p327) target = $region40
        $region39: #{tpu_custom_call.1} parent=27 // pred_region
          %v330 = vld [vmem:[#allocation2] sm:$0xff]
          %v331 = vld [vmem:[#allocation2 + $0x8] sm:$0xff]
          %v332 = vld [vmem:[#allocation2 + $0x10] sm:$0x3]
          %v333 = vld [vmem:[#allocation3] sm:$0xff]
          %v334 = vld [vmem:[#allocation3 + $0x8] sm:$0xff]
          %v335 = vld [vmem:[#allocation3 + $0x10] sm:$0x3]
          %v336 = vsub.f32 %v333, %v330
          %v337 = vsub.f32 %v334, %v331
          %v338 = vsub.f32 %v335, %v332
          %v339 = vld [vmem:[#allocation4] sm:$0xff]
          %v340 = vld [vmem:[#allocation4 + $0x8] sm:$0xff]
          %v341 = vld [vmem:[#allocation4 + $0x10] sm:$0x3]
          %v342 = vsub.f32 %v339, %v330
          %v343 = vsub.f32 %v340, %v331
          %v344 = vsub.f32 %v341, %v332
          %v345 = vadd.f32 %v330, %v336
          %v346 = vadd.f32 %v331, %v337
          %v347 = vadd.f32 %v332, %v338
          %v348 = vadd.f32 %v345, 1e-07
          %v349 = vadd.f32 %v346, 1e-07
          %v350 = vadd.f32 %v347, 1e-07
          %v351 = vrcp.pop %v348
          %v352 = vmul.f32 %v330, %v351
          %v353 = vrcp.pop %v349
          %v354 = vmul.f32 %v331, %v353
          %v355 = vrcp.pop %v350
          %v356 = vmul.f32 %v332, %v355
          %v357 = vadd.f32 %v330, %v342
          %v358 = vadd.f32 %v331, %v343
          %v359 = vadd.f32 %v332, %v344
          %v360 = vadd.f32 %v357, 1e-07
          %v361 = vadd.f32 %v358, 1e-07
          %v362 = vadd.f32 %v359, 1e-07
          %v363 = vrcp.pop %v360
          %v364 = vmul.f32 %v330, %v363
          %v365 = vrcp.pop %v361
          %v366 = vmul.f32 %v331, %v365
          %v367 = vrcp.pop %v362
          %v368 = vmul.f32 %v332, %v367
          %v369 = vmul.f32 %v352, 2.0
          %v370 = vmul.f32 %v354, 2.0
          %v371 = vmul.f32 %v356, 2.0
          %v372 = vmul.f32 %v369, %v364
          %v373 = vmul.f32 %v370, %v366
          %v374 = vmul.f32 %v371, %v368
          %v375 = vadd.f32 %v352, %v364
          %v376 = vadd.f32 %v354, %v366
          %v377 = vadd.f32 %v356, %v368
          %v378 = vadd.f32 %v375, 1e-07
          %v379 = vadd.f32 %v376, 1e-07
          %v380 = vadd.f32 %v377, 1e-07
          %v381 = vrcp.pop %v378
          %v382 = vmul.f32 %v372, %v381
          %v383 = vrcp.pop %v379
          %v384 = vmul.f32 %v373, %v383
          %v385 = vrcp.pop %v380
          %v386 = vmul.f32 %v374, %v385
          %v387 = vmax.f32 %v382, 1e-07
          %v388 = vmax.f32 %v384, 1e-07
          %v389 = vmax.f32 %v386, 1e-07
          %v390 = vmin.f32 %v387, 0.9999999
          %v391 = vmin.f32 %v388, 0.9999999
          %v392 = vmin.f32 %v389, 0.9999999
          %v393 = vsel %vm267, %v390, 0.0
          %v394 = vsel %vm267, %v391, 0.0
          %v395 = vadd.f32 %v393, %v394
          %v396 = vsel %vm270, %v392, 0.0
          %v397 = vadd.f32 %v395, %v396
          %v398 = vrot.slane %v397, 4
          %v399 = vadd.f32 %v397, %v398
          %v400 = vrot.slane %v399, 2
          %v401 = vadd.f32 %v399, %v400
          %v402 = vrot.slane %v401, 1
          %v403 = vadd.f32 %v401, %v402
          %v404 = vmul.f32 %v403, 0.055555556
          %v405 = vsub.f32 1.0, %v404
          %v406 = vld [vmem:[#allocation5] sm:$0xff]
          %v407 = vld [vmem:[#allocation5 + $0x8] sm:$0xff]
          %v408 = vld [vmem:[#allocation5 + $0x10] sm:$0x3]
          %v409 = vsel %vm267, %v406, 0.0
          %v410 = vsel %vm267, %v407, 0.0
          %v411 = vadd.f32 %v409, %v410
          %v412 = vsel %vm270, %v408, 0.0
          %v413 = vadd.f32 %v411, %v412
          %v414 = vrot.slane %v413, 4
          %v415 = vadd.f32 %v413, %v414
          %v416 = vrot.slane %v415, 2
          %v417 = vadd.f32 %v415, %v416
          %v418 = vrot.slane %v417, 1
          %v419 = vadd.f32 %v417, %v418
          %v420 = vsub.f32 0.0, %v419
          %v421 = vmul.f32 %v420, 0.0033333334
          %v422 = vadd.f32 %v405, %v421
          %vm423 = vcmask 0
          %424 = vst.msk [vmem:[#allocation9] sm:$0x1] %vm423, %v422
        $region40: #{tpu_custom_call.1} parent=27 // pred_fallthru
          _
        // Predicated region
        $region41: #{tpu_custom_call.1} parent=27 // pred_check
          %p425 = pneg %p82
        $region42: #{tpu_custom_call.1} parent=27 // pred_check_branch
          %427 = sbr.rel (%p425) target = $region44
        $region43: #{tpu_custom_call.1} parent=27 // pred_region
          %s429 = ssub.s32 16, 16
          %430 = vsyncadd [#allocation8], %s429
          %s432 = sshll.u32 [#allocation9], 4
          %s433 = int_to_ptr.vmem [resolvable:$true] %s432
          %435 = dma.vmem_to_hbm [thread:$0]  %s433, 16, %s2, [#allocation8]
        $region44: #{tpu_custom_call.1} parent=27 // pred_fallthru
          _
        // Predicated region
        $region45: #{tpu_custom_call.1} parent=27 // pred_check
          %p436 = pneg %p82
        $region46: #{tpu_custom_call.1} parent=27 // pred_check_branch
          %438 = sbr.rel (%p436) target = $region48
        $region47: #{tpu_custom_call.1} parent=27 // pred_region
          %439 = dma.done [#allocation8], 16
        $region48: #{tpu_custom_call.1} parent=27 // pred_fallthru
          _
      $region28: #{tpu_custom_call.1} parent=5 // pred_fallthru
        _
      %p440 = scmp.le.s32.totalorder 2, %s12
      // Predicated region
      $region49: #{tpu_custom_call.1} parent=5 // pred_check
        %p441 = pneg %p440
      $region50: #{tpu_custom_call.1} parent=5 // pred_check_branch
        %443 = sbr.rel (%p441) target = $region52
      $region51: #{tpu_custom_call.1} parent=5 // pred_region
        %s444 = ssub.s32 %s12, 2
      $region52: #{tpu_custom_call.1} parent=5 // pred_fallthru
        _
    $region6: #{tpu_custom_call.1} parent=1 // loop_footer
      %s16 = sadd.s32 1, %s12
    $region7: #{tpu_custom_call.1} parent=1 // loop_footer_branch
      %11 = sbr.rel target = $region3
    $region8: #{tpu_custom_call.1} parent=1 // loop_exit
      _
    %445 = vsyncpa [#allocation7], 1
    %s446 = scalar_lea.sflag [#allocation7], 1
    %447 = vsyncpa %s446, 1
    %448 = vsyncpa [#allocation8], 1
    %s449 = scalar_lea.sflag [#allocation8], 1
    %450 = vsyncpa %s449, 1

</llo_original>
